<compile_context>
chip_gen: v6e
topology: v6e:2x2x1
jax: 0.10.0
libtpu: 0.0.40
codegen_flags: <defaults>
</compile_context>

<pallas_src>
import jax
import jax.numpy as jnp
from jax.experimental import pallas as pl
from jax.experimental.pallas import tpu as pltpu

EPS = 1e-5


def _bn_relu_kernel(x_ref, gb_ref, o_ref):
    # x_ref: [R, C] (C on lanes, lane-dense)   gb_ref: [2, C]   o_ref: [R, C]
    x = x_ref[...].astype(jnp.float32)
    inv_r = jnp.float32(1.0 / x.shape[0])

    # Per-channel statistics: sublane reduction over the R rows -> [1, C].
    mean = jnp.sum(x, axis=0, keepdims=True) * inv_r
    centered = x - mean
    # Biased variance (what PyTorch normalizes with in training mode),
    # two-pass form for numerical robustness at small sample counts.
    var = jnp.sum(centered * centered, axis=0, keepdims=True) * inv_r
    inv_std = jax.lax.rsqrt(var + EPS)

    # Fold affine into per-channel scale/shift ([1, C] work), then one
    # mul+add+max pass over the tile; stores are full-lane (unmasked) vst.
    gb = gb_ref[...].astype(jnp.float32)        # [2, C]
    scale = gb[0:1, :] * inv_std                # gamma * inv_std
    shift = gb[1:2, :] - mean * scale           # beta  - mean * scale

    y = x * scale + shift
    o_ref[...] = jnp.maximum(y, 0.0).astype(o_ref.dtype)


def batchnorm_relu(x_nchw, gamma, beta):
    """x_nchw: [N, C, H, W] float32; gamma, beta: [C] float32."""
    N, C, H, W = x_nchw.shape
    R = N * H * W

    # Lane-dense view: channels (C=128) on the lane axis. The NCHW->NHWC
    # transpose is wrapper-side layout plumbing done by XLA outside the kernel.
    x2d = jnp.transpose(x_nchw, (0, 2, 3, 1)).reshape(R, C)
    gb = jnp.stack([gamma.astype(jnp.float32),
                    beta.astype(jnp.float32)], axis=0)          # [2, C]

    # Whole-array, grid-free kernel: ~25 KB in / ~25 KB out fits in one VMEM
    # block; any grid scaffolding would be pure overhead at this shape.
    out2d = pl.pallas_call(
        _bn_relu_kernel,
        out_shape=jax.ShapeDtypeStruct((R, C), x2d.dtype),
        in_specs=[
            pl.BlockSpec(memory_space=pltpu.MemorySpace.VMEM),
            pl.BlockSpec(memory_space=pltpu.MemorySpace.VMEM),
        ],
        out_specs=pl.BlockSpec(memory_space=pltpu.MemorySpace.VMEM),
        cost_estimate=pl.CostEstimate(
            flops=9 * R * C,
            transcendentals=C,
            bytes_accessed=2 * R * C * 4 + 2 * C * 4,
        ),
    )(x2d, gb)

    return jnp.transpose(out2d.reshape(N, H, W, C), (0, 3, 1, 2))


if __name__ == "__main__":
    key = jax.random.PRNGKey(0)
    kx, kg, kb = jax.random.split(key, 3)

    # Shapes implied by the module: input [1, 128, 7, 7], BatchNorm2d(128).
    x = jax.random.normal(kx, (1, 128, 7, 7), dtype=jnp.float32)
    # PyTorch default init is ones/zeros; random values exercise the affine path.
    gamma = 1.0 + 0.1 * jax.random.normal(kg, (128,), dtype=jnp.float32)
    beta = 0.1 * jax.random.normal(kb, (128,), dtype=jnp.float32)

    out = jax.block_until_ready(batchnorm_relu(x, gamma, beta))

    # Pure-JAX reference (training-mode BN + ReLU).
    mean = jnp.mean(x, axis=(0, 2, 3), keepdims=True)
    var = jnp.mean((x - mean) ** 2, axis=(0, 2, 3), keepdims=True)
    ref = (x - mean) * jax.lax.rsqrt(var + EPS)
    ref = ref * gamma.reshape(1, -1, 1, 1) + beta.reshape(1, -1, 1, 1)
    ref = jnp.maximum(ref, 0.0)

    assert out.shape == (1, 128, 7, 7)
    assert jnp.max(jnp.abs(out - ref)) < 1e-4

    print("KERNEL_OK")
</pallas_src>

<mosaic_0001>
module attributes {stable_mosaic.version = 11 : i64} {
  func.func @_bn_relu_kernel(%arg0: memref<49x128xf32, #tpu.memory_space<vmem>>, %arg1: memref<2x128xf32, #tpu.memory_space<vmem>>, %arg2: memref<49x128xf32, #tpu.memory_space<vmem>>) attributes {dimension_semantics = [], scalar_prefetch = 0 : i64, scratch_operands = 0 : i64, tpu.core_type = #tpu.core_type<tc>} {
    %c0 = arith.constant 0 : index
    %c0_0 = arith.constant 0 : index
    %0 = vector.load %arg0[%c0, %c0_0] : memref<49x128xf32, #tpu.memory_space<vmem>>, vector<49x128xf32>
    %cst = arith.constant dense<0.000000e+00> : vector<128xf32>
    %1 = vector.multi_reduction <add>, %0, %cst [0] : vector<49x128xf32> to vector<128xf32>
    %2 = vector.shape_cast %1 : vector<128xf32> to vector<1x128xf32>
    %cst_1 = arith.constant 0.0204081628 : f32
    %3 = vector.broadcast %cst_1 : f32 to vector<1x128xf32>
    %4 = arith.mulf %2, %3 : vector<1x128xf32>
    %5 = vector.broadcast %4 : vector<1x128xf32> to vector<49x128xf32>
    %6 = arith.subf %0, %5 : vector<49x128xf32>
    %7 = arith.mulf %6, %6 : vector<49x128xf32>
    %cst_2 = arith.constant dense<0.000000e+00> : vector<128xf32>
    %8 = vector.multi_reduction <add>, %7, %cst_2 [0] : vector<49x128xf32> to vector<128xf32>
    %9 = vector.shape_cast %8 : vector<128xf32> to vector<1x128xf32>
    %cst_3 = arith.constant 0.0204081628 : f32
    %10 = vector.broadcast %cst_3 : f32 to vector<1x128xf32>
    %11 = arith.mulf %9, %10 : vector<1x128xf32>
    %cst_4 = arith.constant 9.99999974E-6 : f32
    %12 = vector.broadcast %cst_4 : f32 to vector<1x128xf32>
    %13 = arith.addf %11, %12 : vector<1x128xf32>
    %14 = math.rsqrt %13 : vector<1x128xf32>
    %c0_5 = arith.constant 0 : index
    %c0_6 = arith.constant 0 : index
    %15 = vector.load %arg1[%c0_5, %c0_6] : memref<2x128xf32, #tpu.memory_space<vmem>>, vector<2x128xf32>
    %16 = vector.extract_strided_slice %15 {offsets = [0, 0], sizes = [1, 128], strides = [1, 1]} : vector<2x128xf32> to vector<1x128xf32>
    %17 = arith.mulf %16, %14 : vector<1x128xf32>
    %18 = vector.extract_strided_slice %15 {offsets = [1, 0], sizes = [1, 128], strides = [1, 1]} : vector<2x128xf32> to vector<1x128xf32>
    %19 = arith.mulf %4, %17 : vector<1x128xf32>
    %20 = arith.subf %18, %19 : vector<1x128xf32>
    %21 = vector.broadcast %17 : vector<1x128xf32> to vector<49x128xf32>
    %22 = arith.mulf %0, %21 : vector<49x128xf32>
    %23 = vector.broadcast %20 : vector<1x128xf32> to vector<49x128xf32>
    %24 = arith.addf %22, %23 : vector<49x128xf32>
    %cst_7 = arith.constant 0.000000e+00 : f32
    %25 = vector.broadcast %cst_7 : f32 to vector<49x128xf32>
    %26 = arith.maximumf %24, %25 : vector<49x128xf32>
    %c0_8 = arith.constant 0 : index
    %c0_9 = arith.constant 0 : index
    %27 = vector.load %arg2[%c0_8, %c0_9] : memref<49x128xf32, #tpu.memory_space<vmem>>, vector<49x128xf32>
    tpu.vector_store %arg2[%c0_8, %c0_9], %26 {strides = array<i32>} : memref<49x128xf32, #tpu.memory_space<vmem>>, vector<49x128xf32>,
    return
  }
}

</mosaic_0001>

<llo_original>
// kernel: tpu_custom_call.1
$region0: #{tpu_custom_call.1}
  #allocation0 [shape = 'u32[]', space=smem, size = 0x4, offset = 0x4, fixed_abs, tag = 'smem constant byte address 0x4 - core index']
  #allocation1 [shape = 'u32[144,128]{1,0:T(1,128)}', space=vmem, size = 0x12000, scoped, tag = 'internal scratch']
  %s0 = inlined_call_operand.hbm [shape: f32[49,128], index: 0, kind: input, shape index: {}]
  %s1 = inlined_call_operand.hbm [shape: f32[2,128], index: 1, kind: input, shape index: {}]
  %s2 = inlined_call_operand.hbm [shape: f32[49,128], index: 2, kind: output, shape index: {}]
  %s3 = sld [smem:[#allocation0]]
  $region26: #{tpu_custom_call.1} parent=0
    _
  %s5 = ssub.s32 1, %s3
  %s6 = scalar_select 0, %s5, %s3
  $region1: #{tpu_custom_call.1} parent=0
    #allocation2 [shape = 'u8[28672]{0}', space=vmem, size = 0x7000, scoped, tag = 'input window, operand 0, single buffered']
    #allocation3 [shape = 's32[1]{0}', space=sflag, size = 0x4, scoped, tag = 'scoped memory for tpu_custom_call.1']
    #allocation4 [shape = 's32[1]{0}', space=sflag, size = 0x4, scoped, tag = 'scoped memory for tpu_custom_call.1']
    #allocation5 [shape = 'u8[1024]{0}', space=vmem, size = 0x400, scoped, tag = 'input window, operand 1, single buffered']
    #allocation6 [shape = 's32[1]{0}', space=sflag, size = 0x4, scoped, tag = 'scoped memory for tpu_custom_call.1']
    #allocation7 [shape = 'u8[28672]{0}', space=vmem, size = 0x7000, scoped, tag = 'output window, operand 0, single buffered']
    %7 = vsyncpa [#allocation3], 0
    %8 = vsyncpa [#allocation6], 0
    %9 = vsyncpa [#allocation4], 0
    // Predicated region
    $region2: #{tpu_custom_call.1} parent=1 // pred_check
      _
    $region3: #{tpu_custom_call.1} parent=1 // pred_check_branch
      %11 = sbr.rel (0) target = $region5
    $region4: #{tpu_custom_call.1} parent=1 // pred_region
      %s13 = ssub.s32 896, 896
      %14 = vsyncadd [#allocation3], %s13
      %s15 = sshll.u32 [#allocation2], 4
      %s16 = int_to_ptr.vmem [resolvable:$true] %s15
      %21 = dma.hbm_to_vmem [thread:$0]  %s0, 896, %s16, [#allocation3], 128, 128, 8
    $region5: #{tpu_custom_call.1} parent=1 // pred_fallthru
      _
    // Predicated region
    $region6: #{tpu_custom_call.1} parent=1 // pred_check
      _
    $region7: #{tpu_custom_call.1} parent=1 // pred_check_branch
      %23 = sbr.rel (0) target = $region9
    $region8: #{tpu_custom_call.1} parent=1 // pred_region
      %s25 = ssub.s32 32, 32
      %26 = vsyncadd [#allocation6], %s25
      %s28 = sshll.u32 [#allocation5], 4
      %s29 = int_to_ptr.vmem [resolvable:$true] %s28
      %31 = dma.hbm_to_vmem [thread:$0]  %s1, 32, %s29, [#allocation6]
    $region9: #{tpu_custom_call.1} parent=1 // pred_fallthru
      _
    // Predicated region
    $region10: #{tpu_custom_call.1} parent=1 // pred_check
      _
    $region11: #{tpu_custom_call.1} parent=1 // pred_check_branch
      %33 = sbr.rel (0) target = $region13
    $region12: #{tpu_custom_call.1} parent=1 // pred_region
      %34 = dma.done [#allocation3], 896
    $region13: #{tpu_custom_call.1} parent=1 // pred_fallthru
      _
    // Predicated region
    $region14: #{tpu_custom_call.1} parent=1 // pred_check
      _
    $region15: #{tpu_custom_call.1} parent=1 // pred_check_branch
      %36 = sbr.rel (0) target = $region17
    $region16: #{tpu_custom_call.1} parent=1 // pred_region
      %37 = dma.done [#allocation6], 32
    $region17: #{tpu_custom_call.1} parent=1 // pred_fallthru
      _
    %v38 = vld [vmem:[#allocation2] sm:$0xff]
    %v39 = vld [vmem:[#allocation2 + $0x8] sm:$0xff]
    %v40 = vld [vmem:[#allocation2 + $0x10] sm:$0xff]
    %v41 = vld [vmem:[#allocation2 + $0x18] sm:$0xff]
    %v42 = vld [vmem:[#allocation2 + $0x20] sm:$0xff]
    %v43 = vld [vmem:[#allocation2 + $0x28] sm:$0xff]
    %v44 = vld [vmem:[#allocation2 + $0x30] sm:$0x1]
    %v45 = vadd.f32 %v38, %v39
    %v46 = vadd.f32 %v45, %v40
    %v47 = vadd.f32 %v46, %v41
    %v48 = vadd.f32 %v47, %v42
    %v49 = vadd.f32 %v48, %v43
    %vm50 = vcmask 1040384
    %v51 = vsel %vm50, %v44, 0.0
    %v52 = vadd.f32 %v49, %v51
    %v53 = vrot.slane %v52, 4
    %v54 = vadd.f32 %v52, %v53
    %v55 = vrot.slane %v54, 2
    %v56 = vadd.f32 %v54, %v55
    %v57 = vrot.slane %v56, 1
    %v58 = vadd.f32 %v56, %v57
    %v59 = vmul.f32 %v58, 0.020408163
    %v60 = vsub.f32 %v38, %v59
    %v61 = vsub.f32 %v39, %v59
    %v62 = vsub.f32 %v40, %v59
    %v63 = vsub.f32 %v41, %v59
    %v64 = vsub.f32 %v42, %v59
    %v65 = vsub.f32 %v43, %v59
    %v66 = vsub.f32 %v44, %v59
    %v67 = vmul.f32 %v60, %v60
    %v68 = vmul.f32 %v61, %v61
    %v69 = vmul.f32 %v62, %v62
    %v70 = vmul.f32 %v63, %v63
    %v71 = vmul.f32 %v64, %v64
    %v72 = vmul.f32 %v65, %v65
    %v73 = vmul.f32 %v66, %v66
    %v74 = vadd.f32 %v67, %v68
    %v75 = vadd.f32 %v74, %v69
    %v76 = vadd.f32 %v75, %v70
    %v77 = vadd.f32 %v76, %v71
    %v78 = vadd.f32 %v77, %v72
    %v79 = vsel %vm50, %v73, 0.0
    %v80 = vadd.f32 %v78, %v79
    %v81 = vrot.slane %v80, 4
    %v82 = vadd.f32 %v80, %v81
    %v83 = vrot.slane %v82, 2
    %v84 = vadd.f32 %v82, %v83
    %v85 = vrot.slane %v84, 1
    %v86 = vadd.f32 %v84, %v85
    %v87 = vmul.f32 %v86, 0.020408163
    %v88 = vadd.f32 %v87, 1e-05
    %v89 = vrsqrt.pop %v88
    %v90 = vld [vmem:[#allocation5] sm:$0x3]
    %v91 = vmul.f32 %v90, %v89
    %v92 = vmul.f32 %v59, %v91
    %v94 = vrot.slane %v92, 7
    %v96 = vsub.f32 %v90, %v94
    %v97 = vlaneseq
    %v98 = vshrl.u32 %v97, 7
    %v99 = vsub.s32 0, %v98
    %v100 = vrot.slane %v91, %v99
    %v101 = vmul.f32 %v38, %v100
    %v102 = vmul.f32 %v39, %v100
    %v103 = vmul.f32 %v40, %v100
    %v104 = vmul.f32 %v41, %v100
    %v105 = vmul.f32 %v42, %v100
    %v106 = vmul.f32 %v43, %v100
    %v107 = vmul.f32 %v44, %v100
    %v108 = vlaneseq
    %v109 = vshrl.u32 %v108, 7
    %v110 = vsub.s32 1, %v109
    %v111 = vrot.slane %v96, %v110
    %v112 = vadd.f32 %v101, %v111
    %v113 = vadd.f32 %v102, %v111
    %v114 = vadd.f32 %v103, %v111
    %v115 = vadd.f32 %v104, %v111
    %v116 = vadd.f32 %v105, %v111
    %v117 = vadd.f32 %v106, %v111
    %v118 = vadd.f32 %v107, %v111
    %v119 = vmax.f32 %v112, 0.0
    %v120 = vmax.f32 %v113, 0.0
    %v121 = vmax.f32 %v114, 0.0
    %v122 = vmax.f32 %v115, 0.0
    %v123 = vmax.f32 %v116, 0.0
    %v124 = vmax.f32 %v117, 0.0
    %v125 = vmax.f32 %v118, 0.0
    %126 = vst [vmem:[#allocation7] sm:$0xff] %v119
    %127 = vst [vmem:[#allocation7 + $0x8] sm:$0xff] %v120
    %128 = vst [vmem:[#allocation7 + $0x10] sm:$0xff] %v121
    %129 = vst [vmem:[#allocation7 + $0x18] sm:$0xff] %v122
    %130 = vst [vmem:[#allocation7 + $0x20] sm:$0xff] %v123
    %131 = vst [vmem:[#allocation7 + $0x28] sm:$0xff] %v124
    %132 = vst [vmem:[#allocation7 + $0x30] sm:$0x1] %v125
    // Predicated region
    $region18: #{tpu_custom_call.1} parent=1 // pred_check
      _
    $region19: #{tpu_custom_call.1} parent=1 // pred_check_branch
      %134 = sbr.rel (0) target = $region21
    $region20: #{tpu_custom_call.1} parent=1 // pred_region
      %s136 = ssub.s32 896, 896
      %137 = vsyncadd [#allocation4], %s136
      %s138 = sshll.u32 [#allocation7], 4
      %s139 = int_to_ptr.vmem [resolvable:$true] %s138
      %144 = dma.vmem_to_hbm [thread:$0]  %s139, 896, %s2, [#allocation4], 128, 128, 8
    $region21: #{tpu_custom_call.1} parent=1 // pred_fallthru
      _
    // Predicated region
    $region22: #{tpu_custom_call.1} parent=1 // pred_check
      _
    $region23: #{tpu_custom_call.1} parent=1 // pred_check_branch
      %146 = sbr.rel (0) target = $region25
    $region24: #{tpu_custom_call.1} parent=1 // pred_region
      %147 = dma.done [#allocation4], 896
    $region25: #{tpu_custom_call.1} parent=1 // pred_fallthru
      _
    %148 = vsyncpa [#allocation3], 1
    %149 = vsyncpa [#allocation6], 1
    %150 = vsyncpa [#allocation4], 1

</llo_original>
